<compile_context>
chip_gen: v7x
topology: tpu7x:2x2x1
jax: 0.10.0
libtpu: 0.0.40
codegen_flags: <defaults>
</compile_context>

<pallas_src>
import functools

import jax
import jax.numpy as jnp
from jax import lax
from jax.experimental import pallas as pl
from jax.experimental.pallas import tpu as pltpu


def _dsconv_kernel(x_ref, w_ref, p_ref, b1_ref, b2_ref, o_ref, lhs_ref, *,
                   H, WCp, ipt):
    """One grid step = `ipt` whole images (M = ipt*H rows).

    x_ref  : (M, WCp)      bf16  rows = (image, h), lanes = (w, c) c-fastest
    w_ref  : (3*WCp, WCp)  bf16  fused banded 3x3 weights [up | mid | down]
    p_ref  : (WCp, WCo)    bf16  block-diagonal 1x1 weights
    b1/b2  : (1, WCp/WCo)  f32   folded BN biases
    o_ref  : (M, WCo)      f32
    lhs_ref: (M, 3*WCp)    bf16  VMEM scratch holding [x[h-1] | x[h] | x[h+1]]
    """
    # Center tap: lane-aligned full-width copy.
    lhs_ref[:, WCp:2 * WCp] = x_ref[...]

    # H-direction halo via static row-slice copies (no roll/select filler).
    # Image-boundary rows are zeroed explicitly every step (no init dependence),
    # which also prevents halo leakage between images stacked in one tile.
    zrow = jnp.zeros((1, WCp), dtype=lhs_ref.dtype)
    for i in range(ipt):                                   # static unrolled
        base = i * H
        if H > 1:
            # up tap: lhs[r, 0:WCp] = x[r-1]
            lhs_ref[pl.ds(base + 1, H - 1), 0:WCp] = x_ref[pl.ds(base, H - 1), :]
            # down tap: lhs[r, 2WCp:3WCp] = x[r+1]
            lhs_ref[pl.ds(base, H - 1), 2 * WCp:3 * WCp] = x_ref[pl.ds(base + 1, H - 1), :]
        lhs_ref[pl.ds(base, 1), 0:WCp] = zrow                      # top row of image
        lhs_ref[pl.ds(base + H - 1, 1), 2 * WCp:3 * WCp] = zrow    # bottom row of image

    # 3x3 conv (+ folded BN1 scale) == ONE fused matmul: K = 3*WCp.
    acc = jnp.dot(lhs_ref[...], w_ref[...], preferred_element_type=jnp.float32)
    h1 = jnp.maximum(acc + b1_ref[...], 0.0).astype(p_ref.dtype)   # bf16 for MXU

    # 1x1 conv (+ folded BN2 scale): block-diagonal matmul, lane-dense output.
    h2 = jnp.dot(h1, p_ref[...], preferred_element_type=jnp.float32)
    o_ref[...] = jnp.maximum(h2 + b2_ref[...], 0.0).astype(o_ref.dtype)


def _pad_to_lane_multiple(C, W, lane=128):
    """Smallest Cp >= C with (W*Cp) % lane == 0 (bounded search; else no pad)."""
    Cp = C
    while (W * Cp) % lane != 0 and (Cp - C) < lane:
        Cp += 1
    return Cp if (W * Cp) % lane == 0 else C


def _choose_images_per_tile(N, H, m_cap=256):
    """M-tile = ipt*H rows: divisor of N, <= m_cap rows, and leave >=2 grid
    steps when N >= 2 (keeps both v7x TensorCores busy)."""
    divisors = [d for d in range(1, N + 1) if N % d == 0]
    cands = [d for d in divisors if d * H <= m_cap] or [1]
    ipt = max(cands)
    if N // ipt < 2 and N >= 2:
        smaller = [d for d in cands if N // d >= 2]
        if smaller:
            ipt = max(smaller)
    return ipt


def depthwise_separable_convolution(x_nchw, w1_hwio, bn1, w2_io, bn2,
                                    eps=1e-5, mxu_dtype=jnp.bfloat16):
    """x_nchw: [N, Cin, H, W]; w1_hwio: [3, 3, Cin, Cin] (HWIO); w2_io: [Cin, Cout].
    bn1/bn2: dicts with gamma, beta, mean, var (per channel). Returns NCHW f32."""
    N, Cin, H, W = x_nchw.shape
    Cout = w2_io.shape[1]

    # Channel padding so LHS / mid / output lane widths are multiples of 128.
    Cp = _pad_to_lane_multiple(Cin, W)
    Cop = _pad_to_lane_multiple(Cout, W)
    WCp, WCo = W * Cp, W * Cop

    # ---- fold BN (inference) into per-channel scale/bias ----
    def fold(bn):
        s = bn["gamma"].astype(jnp.float32) * lax.rsqrt(bn["var"].astype(jnp.float32) + eps)
        b = bn["beta"].astype(jnp.float32) - bn["mean"].astype(jnp.float32) * s
        return s, b

    s1, b1 = fold(bn1)
    s2, b2 = fold(bn2)

    # Scales folded into the convs' output channels; channels zero-padded.
    w1f = w1_hwio.astype(jnp.float32) * s1[None, None, None, :]          # (3,3,Cin,Cin)
    w1f = jnp.pad(w1f, ((0, 0), (0, 0), (0, Cp - Cin), (0, Cp - Cin)))   # (3,3,Cp,Cp)
    w2f = w2_io.astype(jnp.float32) * s2[None, :]                        # (Cin,Cout)
    w2f = jnp.pad(w2f, ((0, Cp - Cin), (0, Cop - Cout)))                 # (Cp,Cop)

    # Banded matrices B[kh]: (WCp, WCp), entry
    #   B[kh][(w+kw-1)*Cp + ci, w*Cp + co] = w1f[kh, kw, ci, co]
    # (off-band / out-of-range entries are zero -> W-direction padding is free).
    eyes = [jnp.eye(W, k=-(kw - 1), dtype=jnp.float32) for kw in range(3)]
    B_taps = [sum(jnp.kron(eyes[kw], w1f[kh, kw]) for kw in range(3))
              for kh in range(3)]
    # Fused-K weights: row blocks match the LHS layout [x[h-1] | x[h] | x[h+1]].
    Bfull = jnp.concatenate(B_taps, axis=0)                              # (3*WCp, WCp)

    # Block-diagonal pointwise matrix: (WCp, WCo).
    P = jnp.kron(jnp.eye(W, dtype=jnp.float32), w2f)

    bias1 = jnp.tile(jnp.pad(b1, (0, Cp - Cin)), W).reshape(1, WCp).astype(jnp.float32)
    bias2 = jnp.tile(jnp.pad(b2, (0, Cop - Cout)), W).reshape(1, WCo).astype(jnp.float32)

    # NCHW -> (N*H, W*Cp) channel-fastest rows (transpose+pad+cast fuse in XLA).
    x = jnp.transpose(x_nchw, (0, 2, 3, 1))                              # (N,H,W,Cin)
    x = jnp.pad(x, ((0, 0), (0, 0), (0, 0), (0, Cp - Cin)))
    x = x.reshape(N * H, WCp).astype(mxu_dtype)

    ipt = _choose_images_per_tile(N, H)
    TM = ipt * H
    grid = (N // ipt,)

    kernel = functools.partial(_dsconv_kernel, H=H, WCp=WCp, ipt=ipt)

    out = pl.pallas_call(
        kernel,
        out_shape=jax.ShapeDtypeStruct((N * H, WCo), jnp.float32),
        grid_spec=pltpu.PrefetchScalarGridSpec(
            num_scalar_prefetch=0,
            grid=grid,
            in_specs=[
                pl.BlockSpec((TM, WCp), lambda g: (g, 0)),        # activation rows
                pl.BlockSpec((3 * WCp, WCp), lambda g: (0, 0)),   # fused banded 3x3 weights (resident)
                pl.BlockSpec((WCp, WCo), lambda g: (0, 0)),       # block-diag 1x1 weights (resident)
                pl.BlockSpec((1, WCp), lambda g: (0, 0)),         # BN1 bias
                pl.BlockSpec((1, WCo), lambda g: (0, 0)),         # BN2 bias
            ],
            out_specs=pl.BlockSpec((TM, WCo), lambda g: (g, 0)),  # lane-dense store
            scratch_shapes=[pltpu.VMEM((TM, 3 * WCp), mxu_dtype)],
        ),
        compiler_params=pltpu.CompilerParams(
            dimension_semantics=("parallel",)),
    )(x, Bfull.astype(mxu_dtype), P.astype(mxu_dtype), bias1, bias2)

    # (N*H, W*Cop) -> (N, H, W, Cop) -> drop channel padding -> NCHW.
    out = out.reshape(N, H, W, Cop)[..., :Cout]
    return jnp.transpose(out, (0, 3, 1, 2))


def _reference(x_nchw, w1_hwio, bn1, w2_io, bn2, eps=1e-5, mxu_dtype=jnp.bfloat16):
    """Pure-JAX reference with the same bf16 quantization points as the kernel."""
    s1 = bn1["gamma"] / jnp.sqrt(bn1["var"] + eps)
    b1 = bn1["beta"] - bn1["mean"] * s1
    s2 = bn2["gamma"] / jnp.sqrt(bn2["var"] + eps)
    b2 = bn2["beta"] - bn2["mean"] * s2

    x = jnp.transpose(x_nchw, (0, 2, 3, 1)).astype(mxu_dtype).astype(jnp.float32)
    w1f = (w1_hwio.astype(jnp.float32) * s1).astype(mxu_dtype).astype(jnp.float32)
    y = lax.conv_general_dilated(
        x, w1f, window_strides=(1, 1), padding=((1, 1), (1, 1)),
        dimension_numbers=("NHWC", "HWIO", "NHWC"))
    y = jnp.maximum(y + b1, 0.0).astype(mxu_dtype).astype(jnp.float32)
    w2f = (w2_io.astype(jnp.float32) * s2).astype(mxu_dtype).astype(jnp.float32)
    y = jnp.einsum("nhwc,cd->nhwd", y, w2f)
    y = jnp.maximum(y + b2, 0.0)
    return jnp.transpose(y, (0, 3, 1, 2))


if __name__ == "__main__":
    N, Cin, Cout, H, W = 2, 4, 8, 16, 16

    key = jax.random.PRNGKey(0)
    k_x, k_w1, k_w2 = jax.random.split(key, 3)

    x = jax.random.normal(k_x, (N, Cin, H, W), dtype=jnp.float32)
    # conv1 weight: 3x3 dense Cin -> Cin (HWIO); conv2: 1x1, Cin -> Cout.
    w1 = jax.random.normal(k_w1, (3, 3, Cin, Cin), dtype=jnp.float32) * 0.2
    w2 = jax.random.normal(k_w2, (Cin, Cout), dtype=jnp.float32) * 0.2

    bn1 = dict(gamma=jnp.ones((Cin,), jnp.float32),
               beta=jnp.zeros((Cin,), jnp.float32),
               mean=jnp.zeros((Cin,), jnp.float32),
               var=jnp.ones((Cin,), jnp.float32))
    bn2 = dict(gamma=jnp.ones((Cout,), jnp.float32),
               beta=jnp.zeros((Cout,), jnp.float32),
               mean=jnp.zeros((Cout,), jnp.float32),
               var=jnp.ones((Cout,), jnp.float32))

    out = depthwise_separable_convolution(x, w1, bn1, w2, bn2)
    out = jax.block_until_ready(out)

    ref = _reference(x, w1, bn1, w2, bn2)
    assert out.shape == (N, Cout, H, W), out.shape
    # bf16 MXU inputs (f32 accumulation): compare against a quantization-matched
    # reference with a tolerance covering accumulation-order differences.
    assert jnp.allclose(out, ref, rtol=1e-2, atol=1e-2), \
        float(jnp.max(jnp.abs(out - ref)))

    print("KERNEL_OK")
</pallas_src>

<mosaic_0001>
module attributes {stable_mosaic.version = 11 : i64} {
  func.func @_dsconv_kernel(%arg0: i32, %arg1: memref<16x128xbf16, #tpu.memory_space<vmem>>, %arg2: memref<384x128xbf16, #tpu.memory_space<vmem>>, %arg3: memref<128x128xbf16, #tpu.memory_space<vmem>>, %arg4: memref<1x128xf32, #tpu.memory_space<vmem>>, %arg5: memref<1x128xf32, #tpu.memory_space<vmem>>, %arg6: memref<16x128xf32, #tpu.memory_space<vmem>>, %arg7: memref<16x384xbf16, #tpu.memory_space<vmem>>) attributes {dimension_semantics = [#tpu.dimension_semantics<parallel>], iteration_bounds = array<i64: 2>, scalar_prefetch = 0 : i64, scratch_operands = 1 : i64, tpu.core_type = #tpu.core_type<tc>, window_params = [{transform_indices = @transform_0, window_bounds = array<i64: 16, 128>}, {pipeline_mode = #tpu.pipeline_mode<synchronous>, transform_indices = @transform_1, window_bounds = array<i64: 384, 128>}, {pipeline_mode = #tpu.pipeline_mode<synchronous>, transform_indices = @transform_2, window_bounds = array<i64: 128, 128>}, {pipeline_mode = #tpu.pipeline_mode<synchronous>, transform_indices = @transform_3, window_bounds = array<i64: 1, 128>}, {pipeline_mode = #tpu.pipeline_mode<synchronous>, transform_indices = @transform_4, window_bounds = array<i64: 1, 128>}, {transform_indices = @transform_5, window_bounds = array<i64: 16, 128>}]} {
    %c0 = arith.constant 0 : index
    %c0_0 = arith.constant 0 : index
    %0 = vector.load %arg1[%c0, %c0_0] : memref<16x128xbf16, #tpu.memory_space<vmem>>, vector<16x128xbf16>
    %c0_1 = arith.constant 0 : index
    %c128 = arith.constant 128 : index
    %1 = vector.load %arg7[%c0_1, %c128] : memref<16x384xbf16, #tpu.memory_space<vmem>>, vector<16x128xbf16>
    tpu.vector_store %arg7[%c0_1, %c128], %0 {strides = array<i32>} : memref<16x384xbf16, #tpu.memory_space<vmem>>, vector<16x128xbf16>,
    %cst = arith.constant 0.000000e+00 : bf16
    %2 = vector.broadcast %cst : bf16 to vector<1x128xbf16>
    %c0_2 = arith.constant 0 : index
    %c0_3 = arith.constant 0 : index
    %3 = vector.load %arg1[%c0_2, %c0_3] : memref<16x128xbf16, #tpu.memory_space<vmem>>, vector<15x128xbf16>
    %c1 = arith.constant 1 : index
    %c0_4 = arith.constant 0 : index
    %4 = vector.load %arg7[%c1, %c0_4] : memref<16x384xbf16, #tpu.memory_space<vmem>>, vector<15x128xbf16>
    tpu.vector_store %arg7[%c1, %c0_4], %3 {strides = array<i32>} : memref<16x384xbf16, #tpu.memory_space<vmem>>, vector<15x128xbf16>,
    %c1_5 = arith.constant 1 : index
    %c0_6 = arith.constant 0 : index
    %5 = vector.load %arg1[%c1_5, %c0_6] : memref<16x128xbf16, #tpu.memory_space<vmem>>, vector<15x128xbf16>
    %c0_7 = arith.constant 0 : index
    %c256 = arith.constant 256 : index
    %6 = vector.load %arg7[%c0_7, %c256] : memref<16x384xbf16, #tpu.memory_space<vmem>>, vector<15x128xbf16>
    tpu.vector_store %arg7[%c0_7, %c256], %5 {strides = array<i32>} : memref<16x384xbf16, #tpu.memory_space<vmem>>, vector<15x128xbf16>,
    %c0_8 = arith.constant 0 : index
    %c0_9 = arith.constant 0 : index
    %7 = vector.load %arg7[%c0_8, %c0_9] : memref<16x384xbf16, #tpu.memory_space<vmem>>, vector<1x128xbf16>
    tpu.vector_store %arg7[%c0_8, %c0_9], %2 {strides = array<i32>} : memref<16x384xbf16, #tpu.memory_space<vmem>>, vector<1x128xbf16>,
    %c15 = arith.constant 15 : index
    %c256_10 = arith.constant 256 : index
    %8 = vector.load %arg7[%c15, %c256_10] : memref<16x384xbf16, #tpu.memory_space<vmem>>, vector<1x128xbf16>
    tpu.vector_store %arg7[%c15, %c256_10], %2 {strides = array<i32>} : memref<16x384xbf16, #tpu.memory_space<vmem>>, vector<1x128xbf16>,
    %c0_11 = arith.constant 0 : index
    %c0_12 = arith.constant 0 : index
    %9 = vector.load %arg7[%c0_11, %c0_12] : memref<16x384xbf16, #tpu.memory_space<vmem>>, vector<16x384xbf16>
    %c0_13 = arith.constant 0 : index
    %c0_14 = arith.constant 0 : index
    %10 = vector.load %arg2[%c0_13, %c0_14] : memref<384x128xbf16, #tpu.memory_space<vmem>>, vector<384x128xbf16>
    %cst_15 = arith.constant dense<0.000000e+00> : vector<16x128xf32>
    %11 = tpu.matmul %9, %10, %cst_15 {dimension_numbers = #tpu.dot_dimension_numbers<[1], [0], [0], [1], [0, 0, 1, 1], [], []>} : vector<16x384xbf16>, vector<384x128xbf16>, vector<16x128xf32> -> vector<16x128xf32>
    %c0_16 = arith.constant 0 : index
    %c0_17 = arith.constant 0 : index
    %12 = vector.load %arg4[%c0_16, %c0_17] : memref<1x128xf32, #tpu.memory_space<vmem>>, vector<1x128xf32>
    %13 = vector.broadcast %12 : vector<1x128xf32> to vector<16x128xf32>
    %14 = arith.addf %11, %13 : vector<16x128xf32>
    %cst_18 = arith.constant 0.000000e+00 : f32
    %15 = vector.broadcast %cst_18 : f32 to vector<16x128xf32>
    %16 = arith.maximumf %14, %15 : vector<16x128xf32>
    %17 = arith.truncf %16 : vector<16x128xf32> to vector<16x128xbf16>
    %c0_19 = arith.constant 0 : index
    %c0_20 = arith.constant 0 : index
    %18 = vector.load %arg3[%c0_19, %c0_20] : memref<128x128xbf16, #tpu.memory_space<vmem>>, vector<128x128xbf16>
    %cst_21 = arith.constant dense<0.000000e+00> : vector<16x128xf32>
    %19 = tpu.matmul %17, %18, %cst_21 {dimension_numbers = #tpu.dot_dimension_numbers<[1], [0], [0], [1], [0, 0, 1, 1], [], []>} : vector<16x128xbf16>, vector<128x128xbf16>, vector<16x128xf32> -> vector<16x128xf32>
    %c0_22 = arith.constant 0 : index
    %c0_23 = arith.constant 0 : index
    %20 = vector.load %arg5[%c0_22, %c0_23] : memref<1x128xf32, #tpu.memory_space<vmem>>, vector<1x128xf32>
    %21 = vector.broadcast %20 : vector<1x128xf32> to vector<16x128xf32>
    %22 = arith.addf %19, %21 : vector<16x128xf32>
    %cst_24 = arith.constant 0.000000e+00 : f32
    %23 = vector.broadcast %cst_24 : f32 to vector<16x128xf32>
    %24 = arith.maximumf %22, %23 : vector<16x128xf32>
    %c0_25 = arith.constant 0 : index
    %c0_26 = arith.constant 0 : index
    %25 = vector.load %arg6[%c0_25, %c0_26] : memref<16x128xf32, #tpu.memory_space<vmem>>, vector<16x128xf32>
    tpu.vector_store %arg6[%c0_25, %c0_26], %24 {strides = array<i32>} : memref<16x128xf32, #tpu.memory_space<vmem>>, vector<16x128xf32>,
    return
  }
  func.func @transform_0(%arg0: i32) -> (i32, i32) {
    %c0_i32 = arith.constant 0 : i32
    %c0_i32_0 = arith.constant 0 : i32
    return %arg0, %c0_i32 : i32, i32
  }
  func.func @transform_1(%arg0: i32) -> (i32, i32) {
    %c0_i32 = arith.constant 0 : i32
    %c0_i32_0 = arith.constant 0 : i32
    %c0_i32_1 = arith.constant 0 : i32
    return %c0_i32, %c0_i32_0 : i32, i32
  }
  func.func @transform_2(%arg0: i32) -> (i32, i32) {
    %c0_i32 = arith.constant 0 : i32
    %c0_i32_0 = arith.constant 0 : i32
    %c0_i32_1 = arith.constant 0 : i32
    return %c0_i32, %c0_i32_0 : i32, i32
  }
  func.func @transform_3(%arg0: i32) -> (i32, i32) {
    %c0_i32 = arith.constant 0 : i32
    %c0_i32_0 = arith.constant 0 : i32
    %c0_i32_1 = arith.constant 0 : i32
    return %c0_i32, %c0_i32_0 : i32, i32
  }
  func.func @transform_4(%arg0: i32) -> (i32, i32) {
    %c0_i32 = arith.constant 0 : i32
    %c0_i32_0 = arith.constant 0 : i32
    %c0_i32_1 = arith.constant 0 : i32
    return %c0_i32, %c0_i32_0 : i32, i32
  }
  func.func @transform_5(%arg0: i32) -> (i32, i32) {
    %c0_i32 = arith.constant 0 : i32
    %c0_i32_0 = arith.constant 0 : i32
    return %arg0, %c0_i32 : i32, i32
  }
}

</mosaic_0001>

<llo_original>
// kernel: tpu_custom_call.1
$region0: #{tpu_custom_call.1}
  #allocation0 [shape = 'u32[]', space=smem, size = 0x4, offset = 0x4, fixed_abs, tag = 'smem constant byte address 0x4 - core index']
  #allocation1 [shape = 'u32[144,128]{1,0:T(1,128)}', space=vmem, size = 0x12000, scoped, tag = 'internal scratch']
  #allocation2 [shape = 'bf16[16,384]{1,0:T(16,128)(2,1)}', space=vmem, size = 0x3000, scoped, tag = 'scratch operand']
  %s0 = inlined_call_operand.hbm [shape: bf16[32,128], index: 0, kind: input, shape index: {}]
  %s1 = inlined_call_operand.hbm [shape: bf16[384,128], index: 1, kind: input, shape index: {}]
  %s2 = inlined_call_operand.hbm [shape: bf16[128,128], index: 2, kind: input, shape index: {}]
  %s3 = inlined_call_operand.vmem [shape: f32[1,128], index: 3, kind: input, shape index: {}]
  %s4 = inlined_call_operand.vmem [shape: f32[1,128], index: 4, kind: input, shape index: {}]
  %s5 = inlined_call_operand.hbm [shape: f32[32,128], index: 5, kind: output, shape index: {}]
  %s6 = sld [smem:[#allocation0]]
  $region65: #{tpu_custom_call.1} parent=0
    _
  %s8 = ssub.s32 1, %s6
  %s9 = scalar_select 0, %s8, %s6
  $region1: #{tpu_custom_call.1} parent=0
    #allocation3 [shape = 'u8[8192]{0}', space=vmem, size = 0x2000, scoped, tag = 'input window, operand 0']
    #allocation4 [shape = 's32[2]{0}', space=sflag, size = 0x8, scoped, tag = 'scoped memory for tpu_custom_call.1']
    #allocation5 [shape = 's32[2]{0}', space=sflag, size = 0x8, scoped, tag = 'scoped memory for tpu_custom_call.1']
    #allocation6 [shape = 'u8[98304]{0}', space=vmem, size = 0x18000, scoped, tag = 'input window, operand 1, single buffered']
    #allocation7 [shape = 's32[1]{0}', space=sflag, size = 0x4, scoped, tag = 'scoped memory for tpu_custom_call.1']
    #allocation8 [shape = 'u8[32768]{0}', space=vmem, size = 0x8000, scoped, tag = 'input window, operand 2, single buffered']
    #allocation9 [shape = 'u8[16384]{0}', space=vmem, size = 0x4000, scoped, tag = 'output window, operand 0']
    %10 = vsyncpa [#allocation4], 0
    %s11 = scalar_lea.sflag [#allocation4], 1
    %12 = vsyncpa %s11, 0
    %13 = vsyncpa [#allocation7], 0
    %14 = vsyncpa [#allocation5], 0
    %s15 = scalar_lea.sflag [#allocation5], 1
    %16 = vsyncpa %s15, 0
    loop: start=0, step=1, limit=4
    $region2: #{tpu_custom_call.1} parent=1 // loop_pre_header
      _
    $region3: #{tpu_custom_call.1} parent=1 // loop_header
      %s18 = sphi 0, %s22
      %p19 = scmp.ge.s32.totalorder %s18, 4
      %s28 = sphi 0, %s30
      %s31 = sphi 0, %s28
      %s32 = sphi 0, %s31
      %s48 = sphi 0, %s32
      %s52 = sphi 0, %s52
      %s54 = sphi 0, %s52
      %s55 = sphi 0, %s54
      %s69 = sphi 0, %s55
      %s73 = sphi 0, %s73
      %s75 = sphi 0, %s73
      %s76 = sphi 0, %s75
      %s90 = sphi 0, %s76
      %s94 = sphi 0, %s94
      %s96 = sphi 0, %s94
      %s97 = sphi 0, %s96
      %s111 = sphi 0, %s97
      %s115 = sphi 0, %s115
      %s117 = sphi 0, %s115
      %s118 = sphi 0, %s117
      %s132 = sphi 0, %s118
      %s138 = sphi 0, %s140
      %s141 = sphi 0, %s138
      %s142 = sphi 0, %s141
      %s158 = sphi 0, %s142
    $region4: #{tpu_custom_call.1} parent=1 // loop_header_branch
      %21 = sbr.rel (%p19) target = $region8
    $region5: #{tpu_custom_call.1} parent=1 // loop_body
      %s23 = ssub.s32 %s18, 1
      %s24 = ssub.s32 %s18, 2
      %s25 = sadd.s32 %s18, 1
      %s26 = ssub.s32 %s18, %s25
      %p27 = scmp.eq.s32.totalorder %s26, 0
      %s29 = sadd.s32 %s28, 1
      %s30 = scalar_select %p27, %s28, %s29
      %p33 = pneg %p27
      %p34 = scmp.eq.s32.totalorder %s18, 1
      %p35 = por %p33, %p34
      %p36 = scmp.ne.s32.totalorder %s28, %s31
      %p37 = scmp.eq.s32.totalorder %s18, 0
      %p38 = por %p36, %p37
      %p39 = scmp.ne.s32.totalorder %s28, %s31
      %p40 = scmp.eq.s32.totalorder %s23, 1
      %p41 = por %p39, %p40
      %p42 = scmp.ne.s32.totalorder %s31, %s32
      %p43 = scmp.eq.s32.totalorder %s23, 0
      %p44 = por %p42, %p43
      %p45 = scmp.ne.s32.totalorder %s31, %s32
      %p46 = scmp.eq.s32.totalorder %s24, 1
      %p47 = por %p45, %p46
      %p49 = scmp.ne.s32.totalorder %s32, %s48
      %p50 = scmp.eq.s32.totalorder %s24, 0
      %p51 = por %p49, %p50
      %s53 = sadd.s32 %s52, 1
      %p56 = scmp.eq.s32.totalorder %s18, 1
      %p57 = scmp.ne.s32.totalorder %s52, %s54
      %p58 = scmp.eq.s32.totalorder %s18, 0
      %p59 = por %p57, %p58
      %p60 = scmp.ne.s32.totalorder %s52, %s54
      %p61 = scmp.eq.s32.totalorder %s23, 1
      %p62 = por %p60, %p61
      %p63 = scmp.ne.s32.totalorder %s54, %s55
      %p64 = scmp.eq.s32.totalorder %s23, 0
      %p65 = por %p63, %p64
      %p66 = scmp.ne.s32.totalorder %s54, %s55
      %p67 = scmp.eq.s32.totalorder %s24, 1
      %p68 = por %p66, %p67
      %p70 = scmp.ne.s32.totalorder %s55, %s69
      %p71 = scmp.eq.s32.totalorder %s24, 0
      %p72 = por %p70, %p71
      %s74 = sadd.s32 %s73, 1
      %p77 = scmp.eq.s32.totalorder %s18, 1
      %p78 = scmp.ne.s32.totalorder %s73, %s75
      %p79 = scmp.eq.s32.totalorder %s18, 0
      %p80 = por %p78, %p79
      %p81 = scmp.ne.s32.totalorder %s73, %s75
      %p82 = scmp.eq.s32.totalorder %s23, 1
      %p83 = por %p81, %p82
      %p84 = scmp.ne.s32.totalorder %s75, %s76
      %p85 = scmp.eq.s32.totalorder %s23, 0
      %p86 = por %p84, %p85
      %p87 = scmp.ne.s32.totalorder %s75, %s76
      %p88 = scmp.eq.s32.totalorder %s24, 1
      %p89 = por %p87, %p88
      %p91 = scmp.ne.s32.totalorder %s76, %s90
      %p92 = scmp.eq.s32.totalorder %s24, 0
      %p93 = por %p91, %p92
      %s95 = sadd.s32 %s94, 1
      %p98 = scmp.eq.s32.totalorder %s18, 1
      %p99 = scmp.ne.s32.totalorder %s94, %s96
      %p100 = scmp.eq.s32.totalorder %s18, 0
      %p101 = por %p99, %p100
      %p102 = scmp.ne.s32.totalorder %s94, %s96
      %p103 = scmp.eq.s32.totalorder %s23, 1
      %p104 = por %p102, %p103
      %p105 = scmp.ne.s32.totalorder %s96, %s97
      %p106 = scmp.eq.s32.totalorder %s23, 0
      %p107 = por %p105, %p106
      %p108 = scmp.ne.s32.totalorder %s96, %s97
      %p109 = scmp.eq.s32.totalorder %s24, 1
      %p110 = por %p108, %p109
      %p112 = scmp.ne.s32.totalorder %s97, %s111
      %p113 = scmp.eq.s32.totalorder %s24, 0
      %p114 = por %p112, %p113
      %s116 = sadd.s32 %s115, 1
      %p119 = scmp.eq.s32.totalorder %s18, 1
      %p120 = scmp.ne.s32.totalorder %s115, %s117
      %p121 = scmp.eq.s32.totalorder %s18, 0
      %p122 = por %p120, %p121
      %p123 = scmp.ne.s32.totalorder %s115, %s117
      %p124 = scmp.eq.s32.totalorder %s23, 1
      %p125 = por %p123, %p124
      %p126 = scmp.ne.s32.totalorder %s117, %s118
      %p127 = scmp.eq.s32.totalorder %s23, 0
      %p128 = por %p126, %p127
      %p129 = scmp.ne.s32.totalorder %s117, %s118
      %p130 = scmp.eq.s32.totalorder %s24, 1
      %p131 = por %p129, %p130
      %p133 = scmp.ne.s32.totalorder %s118, %s132
      %p134 = scmp.eq.s32.totalorder %s24, 0
      %p135 = por %p133, %p134
      %s136 = ssub.s32 %s18, %s25
      %p137 = scmp.eq.s32.totalorder %s136, 0
      %s139 = sadd.s32 %s138, 1
      %s140 = scalar_select %p137, %s138, %s139
      %p143 = pneg %p137
      %p144 = scmp.eq.s32.totalorder %s18, 1
      %p145 = por %p143, %p144
      %p146 = scmp.ne.s32.totalorder %s138, %s141
      %p147 = scmp.eq.s32.totalorder %s18, 0
      %p148 = por %p146, %p147
      %p149 = scmp.ne.s32.totalorder %s138, %s141
      %p150 = scmp.eq.s32.totalorder %s23, 1
      %p151 = por %p149, %p150
      %p152 = scmp.ne.s32.totalorder %s141, %s142
      %p153 = scmp.eq.s32.totalorder %s23, 0
      %p154 = por %p152, %p153
      %p155 = scmp.ne.s32.totalorder %s141, %s142
      %p156 = scmp.eq.s32.totalorder %s24, 1
      %p157 = por %p155, %p156
      %p159 = scmp.ne.s32.totalorder %s142, %s158
      %p160 = scmp.eq.s32.totalorder %s24, 0
      %p161 = por %p159, %p160
      %p162 = scmp.le.s32.totalorder 1, %s18
      %p163 = scmp.lt.s32.totalorder %s18, 3
      %p164 = pnand %p162, %p163
      %p165 = pneg %p164
      // Predicated region
      $region9: #{tpu_custom_call.1} parent=5 // pred_check
        _
      $region10: #{tpu_custom_call.1} parent=5 // pred_check_branch
        %167 = sbr.rel (%p164) target = $region12
      $region11: #{tpu_custom_call.1} parent=5 // pred_region
        %s168 = ssub.s32 %s18, 1
        // Predicated region
        $region13: #{tpu_custom_call.1} parent=11 // pred_check
          %p169 = pneg %p65
        $region14: #{tpu_custom_call.1} parent=11 // pred_check_branch
          %171 = sbr.rel (%p169) target = $region16
        $region15: #{tpu_custom_call.1} parent=11 // pred_region
          %s173 = ssub.s32 3072, 3072
          %174 = vsyncadd [#allocation7], %s173
          %s175 = sshll.u32 [#allocation6], 4
          %s176 = int_to_ptr.vmem [resolvable:$true] %s175
          %181 = dma.hbm_to_vmem [thread:$0]  %s1, 3072, %s176, [#allocation7], 64, 64, 4
        $region16: #{tpu_custom_call.1} parent=11 // pred_fallthru
          _
        // Predicated region
        $region17: #{tpu_custom_call.1} parent=11 // pred_check
          %p182 = pneg %p86
        $region18: #{tpu_custom_call.1} parent=11 // pred_check_branch
          %184 = sbr.rel (%p182) target = $region20
        $region19: #{tpu_custom_call.1} parent=11 // pred_region
          %s186 = ssub.s32 1024, 1024
          %187 = vsyncadd [#allocation7], %s186
          %s188 = sshll.u32 [#allocation8], 4
          %s189 = int_to_ptr.vmem [resolvable:$true] %s188
          %194 = dma.hbm_to_vmem [thread:$0]  %s2, 1024, %s189, [#allocation7], 64, 64, 4
        $region20: #{tpu_custom_call.1} parent=11 // pred_fallthru
          _
        // Predicated region
        $region21: #{tpu_custom_call.1} parent=11 // pred_check
          %p195 = pneg %p107
        $region22: #{tpu_custom_call.1} parent=11 // pred_check_branch
          %197 = sbr.rel (%p195) target = $region24
        $region23: #{tpu_custom_call.1} parent=11 // pred_region
          _
        $region24: #{tpu_custom_call.1} parent=11 // pred_fallthru
          _
        // Predicated region
        $region25: #{tpu_custom_call.1} parent=11 // pred_check
          %p198 = pneg %p128
        $region26: #{tpu_custom_call.1} parent=11 // pred_check_branch
          %200 = sbr.rel (%p198) target = $region28
        $region27: #{tpu_custom_call.1} parent=11 // pred_region
          _
        $region28: #{tpu_custom_call.1} parent=11 // pred_fallthru
          _
      $region12: #{tpu_custom_call.1} parent=5 // pred_fallthru
        _
      %p201 = scmp.lt.s32.totalorder %s18, 2
      // Predicated region
      $region29: #{tpu_custom_call.1} parent=5 // pred_check
        %p202 = pneg %p201
      $region30: #{tpu_custom_call.1} parent=5 // pred_check_branch
        %204 = sbr.rel (%p202) target = $region32
      $region31: #{tpu_custom_call.1} parent=5 // pred_region
        // Predicated region
        $region33: #{tpu_custom_call.1} parent=31 // pred_check
          %p205 = pneg %p38
        $region34: #{tpu_custom_call.1} parent=31 // pred_check_branch
          %207 = sbr.rel (%p205) target = $region36
        $region35: #{tpu_custom_call.1} parent=31 // pred_region
          %s208 = sand.u32 %s28, 1
          %s209 = scalar_lea.sflag [#allocation4], %s208
          %s210 = sand.u32 %s28, 1
          %s211 = smul.addr %s210, 8
          %s212 = scalar_lea.vmem [#allocation3], %s211
          %s213 = smul.u32 2, %s18
          %s215 = ssub.s32 128, 128
          %216 = vsyncadd %s209, %s215
          %s217 = smul.addr %s213, 64
          %s218 = scalar_lea.hbm %s0, %s217
          %s219 = sshll.u32 %s212, 4
          %s220 = int_to_ptr.vmem [resolvable:$true] %s219
          %225 = dma.hbm_to_vmem [thread:$0]  %s218, 128, %s220, %s209, 64, 64, 4
        $region36: #{tpu_custom_call.1} parent=31 // pred_fallthru
          _
      $region32: #{tpu_custom_call.1} parent=5 // pred_fallthru
        _
      %p226 = scmp.le.s32.totalorder 1, %s18
      %p227 = scmp.lt.s32.totalorder %s18, 3
      %p228 = pnand %p226, %p227
      %p229 = pneg %p228
      // Predicated region
      $region37: #{tpu_custom_call.1} parent=5 // pred_check
        _
      $region38: #{tpu_custom_call.1} parent=5 // pred_check_branch
        %231 = sbr.rel (%p228) target = $region40
      $region39: #{tpu_custom_call.1} parent=5 // pred_region
        %s232 = ssub.s32 %s18, 1
        %s233 = sand.u32 %s31, 1
        %s234 = scalar_lea.sflag [#allocation4], %s233
        %s235 = sand.u32 %s31, 1
        %s236 = smul.addr %s235, 8
        %s237 = scalar_lea.vmem [#allocation3], %s236
        // Predicated region
        $region41: #{tpu_custom_call.1} parent=39 // pred_check
          %p238 = pneg %p44
        $region42: #{tpu_custom_call.1} parent=39 // pred_check_branch
          %240 = sbr.rel (%p238) target = $region44
        $region43: #{tpu_custom_call.1} parent=39 // pred_region
          %241 = dma.done %s234, 128
        $region44: #{tpu_custom_call.1} parent=39 // pred_fallthru
          _
        // Predicated region
        $region45: #{tpu_custom_call.1} parent=39 // pred_check
          %p242 = pneg %p65
        $region46: #{tpu_custom_call.1} parent=39 // pred_check_branch
          %244 = sbr.rel (%p242) target = $region48
        $region47: #{tpu_custom_call.1} parent=39 // pred_region
          %245 = dma.done [#allocation7], 3072
        $region48: #{tpu_custom_call.1} parent=39 // pred_fallthru
          _
        // Predicated region
        $region49: #{tpu_custom_call.1} parent=39 // pred_check
          %p246 = pneg %p86
        $region50: #{tpu_custom_call.1} parent=39 // pred_check_branch
          %248 = sbr.rel (%p246) target = $region52
        $region51: #{tpu_custom_call.1} parent=39 // pred_region
          %249 = dma.done [#allocation7], 1024
        $region52: #{tpu_custom_call.1} parent=39 // pred_fallthru
          _
        %s250 = sand.u32 %s31, 1
        %s251 = scalar_lea.sflag [#allocation4], %s250
        %s252 = sand.u32 %s31, 1
        %s253 = smul.addr %s252, 8
        %s254 = scalar_lea.vmem [#allocation3], %s253
        %p255 = pneg %p44
        %p256 = pneg %p41
        %p257 = pneg %p65
        %p258 = pneg %p62
        %p259 = pneg %p86
        %p260 = pneg %p83
        %p261 = pneg %p107
        %p262 = pneg %p104
        %p263 = pneg %p128
        %p264 = pneg %p125
        %p265 = pneg %p154
        %p266 = pneg %p151
        %s267 = sand.u32 %s141, 1
        %s268 = scalar_lea.sflag [#allocation5], %s267
        %s269 = sand.u32 %s141, 1
        %s270 = smul.addr %s269, 16
        %s271 = scalar_lea.vmem [#allocation9], %s270
        %s272 = smul.u32 2, %s23
        %s273 = smul.u32 2, %s23
        %v275 = vld [vmem:[%s237] sm:$0xf]
        %v276 = vld [vmem:[%s237 + $0x4] sm:$0xf]
        %v279 = vunpack.c.l.b16 %v275
        %v280 = vunpack.c.l.b16 %v276
        %v281 = vpack.c.b16 %v280, %v279
        %283 = vst [vmem:[#allocation2 + $0x8] sm:$0xff] %v281
        %v284 = vld [vmem:[%s237] sm:$0xf]
        %v285 = vld [vmem:[%s237 + $0x4] sm:$0xf]
        %v288 = vunpack.c.l.b16 %v284
        %v289 = vunpack.c.l.b16 %v285
        %v290 = vpack.c.b16 %v289, %v288
        %v292 = vshrl.u32 %v290, 16
        %v294 = vrot.slane %v292, 7
        %v295 = vshll.u32 %v290, 16
        %v297 = vor.u32 %v294, %v295
        %vm299 = vcmask 1047552
        %vm300 = vsmask.f32 7938
        %vm301 = vmand %vm299, %vm300
        %v302 = vld [vmem:[#allocation2] sm:$0xff]
        %v303 = vsel %vm301, %v297, %v302
        %304 = vst [vmem:[#allocation2] sm:$0xff] %v303
        %v305 = vld [vmem:[%s237] sm:$0xf]
        %v306 = vld [vmem:[%s237 + $0x4] sm:$0xf]
        %v309 = vunpack.c.l.b16 %v305
        %v310 = vunpack.c.l.b16 %v306
        %v311 = vpack.c.b16 %v310, %v309
        %v313 = vshrl.u32 %v311, 16
        %v315 = vshll.u32 %v311, 16
        %v317 = vrot.slane %v315, 1
        %v318 = vor.u32 %v313, %v317
        %vm320 = vsmask.f32 7424
        %vm321 = vmand %vm299, %vm320
        %v322 = vld [vmem:[#allocation2 + $0x10] sm:$0xff]
        %v323 = vsel %vm321, %v318, %v322
        %324 = vst [vmem:[#allocation2 + $0x10] sm:$0xff] %v323
        %vm325 = vcmask 1040384
        %vm326 = vsmask.f32 256
        %vm327 = vmand %vm325, %vm326
        %v328 = vld [vmem:[#allocation2] sm:$0x1]
        %v329 = vsel %vm327, 0, %v328
        %330 = vst [vmem:[#allocation2] sm:$0x1] %v329
        %vm331 = vcmask 1047559
        %vm332 = vsmask.f32 7966
        %vm333 = vmand %vm331, %vm332
        %v334 = vld [vmem:[#allocation2 + $0x10] sm:$0x80]
        %v335 = vsel %vm333, 0, %v334
        %336 = vst [vmem:[#allocation2 + $0x10] sm:$0x80] %v335
        %v337 = vld [vmem:[#allocation2] sm:$0xff]
        %v338 = vld [vmem:[#allocation2 + $0x8] sm:$0xff]
        %v339 = vld [vmem:[#allocation2 + $0x10] sm:$0xff]
        %v340 = vld [vmem:[#allocation6] sm:$0xf]
        %v341 = vld [vmem:[#allocation6 + $0x4] sm:$0xf]
        %v342 = vld [vmem:[#allocation6 + $0x8] sm:$0xf]
        %v343 = vld [vmem:[#allocation6 + $0xc] sm:$0xf]
        %v344 = vld [vmem:[#allocation6 + $0x10] sm:$0xf]
        %v345 = vld [vmem:[#allocation6 + $0x14] sm:$0xf]
        %v346 = vld [vmem:[#allocation6 + $0x18] sm:$0xf]
        %v347 = vld [vmem:[#allocation6 + $0x1c] sm:$0xf]
        %v348 = vld [vmem:[#allocation6 + $0x20] sm:$0xf]
        %v349 = vld [vmem:[#allocation6 + $0x24] sm:$0xf]
        %v350 = vld [vmem:[#allocation6 + $0x28] sm:$0xf]
        %v351 = vld [vmem:[#allocation6 + $0x2c] sm:$0xf]
        %v352 = vld [vmem:[#allocation6 + $0x30] sm:$0xf]
        %v353 = vld [vmem:[#allocation6 + $0x34] sm:$0xf]
        %v354 = vld [vmem:[#allocation6 + $0x38] sm:$0xf]
        %v355 = vld [vmem:[#allocation6 + $0x3c] sm:$0xf]
        %v356 = vld [vmem:[#allocation6 + $0x40] sm:$0xf]
        %v357 = vld [vmem:[#allocation6 + $0x44] sm:$0xf]
        %v358 = vld [vmem:[#allocation6 + $0x48] sm:$0xf]
        %v359 = vld [vmem:[#allocation6 + $0x4c] sm:$0xf]
        %v360 = vld [vmem:[#allocation6 + $0x50] sm:$0xf]
        %v361 = vld [vmem:[#allocation6 + $0x54] sm:$0xf]
        %v362 = vld [vmem:[#allocation6 + $0x58] sm:$0xf]
        %v363 = vld [vmem:[#allocation6 + $0x5c] sm:$0xf]
        %v364 = vld [vmem:[#allocation6 + $0x60] sm:$0xf]
        %v365 = vld [vmem:[#allocation6 + $0x64] sm:$0xf]
        %v366 = vld [vmem:[#allocation6 + $0x68] sm:$0xf]
        %v367 = vld [vmem:[#allocation6 + $0x6c] sm:$0xf]
        %v368 = vld [vmem:[#allocation6 + $0x70] sm:$0xf]
        %v369 = vld [vmem:[#allocation6 + $0x74] sm:$0xf]
        %v370 = vld [vmem:[#allocation6 + $0x78] sm:$0xf]
        %v371 = vld [vmem:[#allocation6 + $0x7c] sm:$0xf]
        %v372 = vld [vmem:[#allocation6 + $0x80] sm:$0xf]
        %v373 = vld [vmem:[#allocation6 + $0x84] sm:$0xf]
        %v374 = vld [vmem:[#allocation6 + $0x88] sm:$0xf]
        %v375 = vld [vmem:[#allocation6 + $0x8c] sm:$0xf]
        %v376 = vld [vmem:[#allocation6 + $0x90] sm:$0xf]
        %v377 = vld [vmem:[#allocation6 + $0x94] sm:$0xf]
        %v378 = vld [vmem:[#allocation6 + $0x98] sm:$0xf]
        %v379 = vld [vmem:[#allocation6 + $0x9c] sm:$0xf]
        %v380 = vld [vmem:[#allocation6 + $0xa0] sm:$0xf]
        %v381 = vld [vmem:[#allocation6 + $0xa4] sm:$0xf]
        %v382 = vld [vmem:[#allocation6 + $0xa8] sm:$0xf]
        %v383 = vld [vmem:[#allocation6 + $0xac] sm:$0xf]
        %v384 = vld [vmem:[#allocation6 + $0xb0] sm:$0xf]
        %v385 = vld [vmem:[#allocation6 + $0xb4] sm:$0xf]
        %v386 = vld [vmem:[#allocation6 + $0xb8] sm:$0xf]
        %v387 = vld [vmem:[#allocation6 + $0xbc] sm:$0xf]
        %v388 = vld [vmem:[%s3] sm:$0x1]
        %v390 = vlaneseq
        %v391 = vshrl.u32 %v390, 7
        %v392 = vsub.s32 0, %v391
        %v393 = vrot.slane %v388, %v392
        %v443 = vunpack.c.l.b16 %v340
        %v444 = vunpack.c.l.b16 %v341
        %v445 = vunpack.c.l.b16 %v342
        %v446 = vunpack.c.l.b16 %v343
        %v447 = vunpack.c.l.b16 %v344
        %v448 = vunpack.c.l.b16 %v345
        %v449 = vunpack.c.l.b16 %v346
        %v450 = vunpack.c.l.b16 %v347
        %v451 = vunpack.c.l.b16 %v348
        %v452 = vunpack.c.l.b16 %v349
        %v453 = vunpack.c.l.b16 %v350
        %v454 = vunpack.c.l.b16 %v351
        %v455 = vunpack.c.l.b16 %v352
        %v456 = vunpack.c.l.b16 %v353
        %v457 = vunpack.c.l.b16 %v354
        %v458 = vunpack.c.l.b16 %v355
        %v459 = vunpack.c.l.b16 %v356
        %v460 = vunpack.c.l.b16 %v357
        %v461 = vunpack.c.l.b16 %v358
        %v462 = vunpack.c.l.b16 %v359
        %v463 = vunpack.c.l.b16 %v360
        %v464 = vunpack.c.l.b16 %v361
        %v465 = vunpack.c.l.b16 %v362
        %v466 = vunpack.c.l.b16 %v363
        %v467 = vunpack.c.l.b16 %v364
        %v468 = vunpack.c.l.b16 %v365
        %v469 = vunpack.c.l.b16 %v366
        %v470 = vunpack.c.l.b16 %v367
        %v471 = vunpack.c.l.b16 %v368
        %v472 = vunpack.c.l.b16 %v369
        %v473 = vunpack.c.l.b16 %v370
        %v474 = vunpack.c.l.b16 %v371
        %v475 = vunpack.c.l.b16 %v372
        %v476 = vunpack.c.l.b16 %v373
        %v477 = vunpack.c.l.b16 %v374
        %v478 = vunpack.c.l.b16 %v375
        %v479 = vunpack.c.l.b16 %v376
        %v480 = vunpack.c.l.b16 %v377
        %v481 = vunpack.c.l.b16 %v378
        %v482 = vunpack.c.l.b16 %v379
        %v483 = vunpack.c.l.b16 %v380
        %v484 = vunpack.c.l.b16 %v381
        %v485 = vunpack.c.l.b16 %v382
        %v486 = vunpack.c.l.b16 %v383
        %v487 = vunpack.c.l.b16 %v384
        %v488 = vunpack.c.l.b16 %v385
        %v489 = vunpack.c.l.b16 %v386
        %v490 = vunpack.c.l.b16 %v387
        %v491 = vpack.c.b16 %v444, %v443
        %v492 = vpack.c.b16 %v446, %v445
        %v493 = vpack.c.b16 %v448, %v447
        %v494 = vpack.c.b16 %v450, %v449
        %v495 = vpack.c.b16 %v452, %v451
        %v496 = vpack.c.b16 %v454, %v453
        %v497 = vpack.c.b16 %v456, %v455
        %v498 = vpack.c.b16 %v458, %v457
        %v499 = vpack.c.b16 %v460, %v459
        %v500 = vpack.c.b16 %v462, %v461
        %v501 = vpack.c.b16 %v464, %v463
        %v502 = vpack.c.b16 %v466, %v465
        %v503 = vpack.c.b16 %v468, %v467
        %v504 = vpack.c.b16 %v470, %v469
        %v505 = vpack.c.b16 %v472, %v471
        %v506 = vpack.c.b16 %v474, %v473
        %v507 = vpack.c.b16 %v476, %v475
        %v508 = vpack.c.b16 %v478, %v477
        %v509 = vpack.c.b16 %v480, %v479
        %v510 = vpack.c.b16 %v482, %v481
        %v511 = vpack.c.b16 %v484, %v483
        %v512 = vpack.c.b16 %v486, %v485
        %v513 = vpack.c.b16 %v488, %v487
        %v514 = vpack.c.b16 %v490, %v489
        %539 = vmatprep.subr.bf16.mxu0 0
        %540 = vmatpush1.bf16.msra.mxu0 %v491
        %541 = vmatprep.subr.bf16.mxu0 0
        %542 = vmatpush1.bf16.msra.mxu0 %v492
        %543 = vmatprep.subr.bf16.mxu0 0
        %544 = vmatpush1.bf16.msra.mxu0 %v493
        %545 = vmatprep.subr.bf16.mxu0 0
        %546 = vmatpush1.bf16.msra.mxu0 %v494
        %547 = vmatprep.subr.bf16.mxu0 0
        %548 = vmatpush1.bf16.msra.mxu0 %v495
        %549 = vmatprep.subr.bf16.mxu0 0
        %550 = vmatpush1.bf16.msra.mxu0 %v496
        %551 = vmatprep.subr.bf16.mxu0 0
        %552 = vmatpush1.bf16.msra.mxu0 %v497
        %553 = vmatprep.subr.bf16.mxu0 0
        %554 = vmatpush1.bf16.msra.mxu0 %v498
        %555 = vmatprep.subr.bf16.mxu0 0
        %556 = vmatpush1.bf16.msra.mxu0 %v499
        %557 = vmatprep.subr.bf16.mxu0 0
        %558 = vmatpush1.bf16.msra.mxu0 %v500
        %559 = vmatprep.subr.bf16.mxu0 0
        %560 = vmatpush1.bf16.msra.mxu0 %v501
        %561 = vmatprep.subr.bf16.mxu0 0
        %562 = vmatpush1.bf16.msra.mxu0 %v502
        %563 = vmatprep.subr.bf16.mxu0 0
        %564 = vmatpush1.bf16.msra.mxu0 %v503
        %565 = vmatprep.subr.bf16.mxu0 0
        %566 = vmatpush1.bf16.msra.mxu0 %v504
        %567 = vmatprep.subr.bf16.mxu0 0
        %568 = vmatpush1.bf16.msra.mxu0 %v505
        %569 = vmatprep.subr.bf16.mxu0 0
        %570 = vmatpush1.bf16.msra.mxu0 %v506
        %571 = vmatprep.mubr.bf16.mxu0 %v338
        %572 = vmatmul.mubr.bf16.gmra.mrb[0].mxu0 %v337
        %v573 = vpop.f32.mrb[0].mxu0
        %v574 = vadd.f32 %v393, %v573
        %v575 = vpop.f32.mrb[0].mxu0
        %v576 = vpop.f32.mrb[0].mxu0
        %v577 = vadd.f32 %v393, %v576
        %v578 = vpop.f32.mrb[0].mxu0
        %579 = vdwg.mxu0
        %580 = vmatprep.subr.bf16.mxu0 0
        %581 = vmatpush1.bf16.msra.mxu0 %v507
        %582 = vmatprep.subr.bf16.mxu0 0
        %583 = vmatpush1.bf16.msra.mxu0 %v508
        %584 = vmatprep.subr.bf16.mxu0 0
        %585 = vmatpush1.bf16.msra.mxu0 %v509
        %586 = vmatprep.subr.bf16.mxu0 0
        %587 = vmatpush1.bf16.msra.mxu0 %v510
        %588 = vmatprep.subr.bf16.mxu0 0
        %589 = vmatpush1.bf16.msra.mxu0 %v511
        %590 = vmatprep.subr.bf16.mxu0 0
        %591 = vmatpush1.bf16.msra.mxu0 %v512
        %592 = vmatprep.subr.bf16.mxu0 0
        %593 = vmatpush1.bf16.msra.mxu0 %v513
        %594 = vmatprep.subr.bf16.mxu0 0
        %595 = vmatpush1.bf16.msra.mxu0 %v514
        %596 = vmatprep.subr.bf16.mxu0 0
        %597 = vmatpush1.bf16.msra.mxu0 0
        %598 = vmatprep.subr.bf16.mxu0 0
        %599 = vmatpush1.bf16.msra.mxu0 0
        %600 = vmatprep.subr.bf16.mxu0 0
        %601 = vmatpush1.bf16.msra.mxu0 0
        %602 = vmatprep.subr.bf16.mxu0 0
        %603 = vmatpush1.bf16.msra.mxu0 0
        %604 = vmatprep.subr.bf16.mxu0 0
        %605 = vmatpush1.bf16.msra.mxu0 0
        %606 = vmatprep.subr.bf16.mxu0 0
        %607 = vmatpush1.bf16.msra.mxu0 0
        %608 = vmatprep.subr.bf16.mxu0 0
        %609 = vmatpush1.bf16.msra.mxu0 0
        %610 = vmatprep.subr.bf16.mxu0 0
        %611 = vmatpush1.bf16.msra.mxu0 0
        %612 = vmatprep.mubr.bf16.mxu0 0
        %613 = vmatmul.mubr.bf16.gmra.mrb[0].mxu0 %v339
        %v614 = vpop.f32.mrb[0].mxu0
        %v615 = vadd.f32 %v574, %v614
        %v616 = vpop.f32.mrb[0].mxu0
        %v617 = vpop.f32.mrb[0].mxu0
        %v618 = vadd.f32 %v577, %v617
        %v619 = vpop.f32.mrb[0].mxu0
        %620 = vdwg.mxu0
        %v621 = vmax.f32 %v615, 0.0
        %v622 = vmax.f32 %v618, 0.0
        %v623 = vpack.c.bf16 %v622, %v621
        %v624 = vld [vmem:[#allocation8] sm:$0xf]
        %v625 = vld [vmem:[#allocation8 + $0x4] sm:$0xf]
        %v626 = vld [vmem:[#allocation8 + $0x8] sm:$0xf]
        %v627 = vld [vmem:[#allocation8 + $0xc] sm:$0xf]
        %v628 = vld [vmem:[#allocation8 + $0x10] sm:$0xf]
        %v629 = vld [vmem:[#allocation8 + $0x14] sm:$0xf]
        %v630 = vld [vmem:[#allocation8 + $0x18] sm:$0xf]
        %v631 = vld [vmem:[#allocation8 + $0x1c] sm:$0xf]
        %v632 = vld [vmem:[#allocation8 + $0x20] sm:$0xf]
        %v633 = vld [vmem:[#allocation8 + $0x24] sm:$0xf]
        %v634 = vld [vmem:[#allocation8 + $0x28] sm:$0xf]
        %v635 = vld [vmem:[#allocation8 + $0x2c] sm:$0xf]
        %v636 = vld [vmem:[#allocation8 + $0x30] sm:$0xf]
        %v637 = vld [vmem:[#allocation8 + $0x34] sm:$0xf]
        %v638 = vld [vmem:[#allocation8 + $0x38] sm:$0xf]
        %v639 = vld [vmem:[#allocation8 + $0x3c] sm:$0xf]
        %v640 = vld [vmem:[%s4] sm:$0x1]
        %v642 = vlaneseq
        %v643 = vshrl.u32 %v642, 7
        %v644 = vsub.s32 0, %v643
        %v645 = vrot.slane %v640, %v644
        %v663 = vunpack.c.l.b16 %v624
        %v664 = vunpack.c.l.b16 %v625
        %v665 = vunpack.c.l.b16 %v626
        %v666 = vunpack.c.l.b16 %v627
        %v667 = vunpack.c.l.b16 %v628
        %v668 = vunpack.c.l.b16 %v629
        %v669 = vunpack.c.l.b16 %v630
        %v670 = vunpack.c.l.b16 %v631
        %v671 = vunpack.c.l.b16 %v632
        %v672 = vunpack.c.l.b16 %v633
        %v673 = vunpack.c.l.b16 %v634
        %v674 = vunpack.c.l.b16 %v635
        %v675 = vunpack.c.l.b16 %v636
        %v676 = vunpack.c.l.b16 %v637
        %v677 = vunpack.c.l.b16 %v638
        %v678 = vunpack.c.l.b16 %v639
        %v679 = vpack.c.b16 %v664, %v663
        %v680 = vpack.c.b16 %v666, %v665
        %v681 = vpack.c.b16 %v668, %v667
        %v682 = vpack.c.b16 %v670, %v669
        %v683 = vpack.c.b16 %v672, %v671
        %v684 = vpack.c.b16 %v674, %v673
        %v685 = vpack.c.b16 %v676, %v675
        %v686 = vpack.c.b16 %v678, %v677
        %695 = vmatprep.subr.bf16.mxu0 0
        %696 = vmatpush1.bf16.msra.mxu0 %v679
        %697 = vmatprep.subr.bf16.mxu0 0
        %698 = vmatpush1.bf16.msra.mxu0 %v680
        %699 = vmatprep.subr.bf16.mxu0 0
        %700 = vmatpush1.bf16.msra.mxu0 %v681
        %701 = vmatprep.subr.bf16.mxu0 0
        %702 = vmatpush1.bf16.msra.mxu0 %v682
        %703 = vmatprep.subr.bf16.mxu0 0
        %704 = vmatpush1.bf16.msra.mxu0 %v683
        %705 = vmatprep.subr.bf16.mxu0 0
        %706 = vmatpush1.bf16.msra.mxu0 %v684
        %707 = vmatprep.subr.bf16.mxu0 0
        %708 = vmatpush1.bf16.msra.mxu0 %v685
        %709 = vmatprep.subr.bf16.mxu0 0
        %710 = vmatpush1.bf16.msra.mxu0 %v686
        %711 = vmatprep.subr.bf16.mxu0 0
        %712 = vmatpush1.bf16.msra.mxu0 0
        %713 = vmatprep.subr.bf16.mxu0 0
        %714 = vmatpush1.bf16.msra.mxu0 0
        %715 = vmatprep.subr.bf16.mxu0 0
        %716 = vmatpush1.bf16.msra.mxu0 0
        %717 = vmatprep.subr.bf16.mxu0 0
        %718 = vmatpush1.bf16.msra.mxu0 0
        %719 = vmatprep.subr.bf16.mxu0 0
        %720 = vmatpush1.bf16.msra.mxu0 0
        %721 = vmatprep.subr.bf16.mxu0 0
        %722 = vmatpush1.bf16.msra.mxu0 0
        %723 = vmatprep.subr.bf16.mxu0 0
        %724 = vmatpush1.bf16.msra.mxu0 0
        %725 = vmatprep.subr.bf16.mxu0 0
        %726 = vmatpush1.bf16.msra.mxu0 0
        %727 = vmatprep.mubr.bf16.mxu0 0
        %728 = vmatmul.mubr.bf16.gmra.mrb[0].mxu0 %v623
        %v729 = vpop.f32.mrb[0].mxu0
        %v730 = vadd.f32 %v645, %v729
        %v731 = vpop.f32.mrb[0].mxu0
        %v732 = vpop.f32.mrb[0].mxu0
        %v733 = vadd.f32 %v645, %v732
        %v734 = vpop.f32.mrb[0].mxu0
        %735 = vdwg.mxu0
        %v736 = vmax.f32 %v730, 0.0
        %v737 = vmax.f32 %v733, 0.0
        %738 = vst [vmem:[%s271] sm:$0xff] %v736
        %739 = vst [vmem:[%s271 + $0x8] sm:$0xff] %v737
        %s740 = sand.u32 %s141, 1
        %s741 = scalar_lea.sflag [#allocation5], %s740
        %s742 = sand.u32 %s141, 1
        %s743 = smul.addr %s742, 16
        %s744 = scalar_lea.vmem [#allocation9], %s743
        // Predicated region
        $region53: #{tpu_custom_call.1} parent=39 // pred_check
          %p745 = pneg %p151
        $region54: #{tpu_custom_call.1} parent=39 // pred_check_branch
          %747 = sbr.rel (%p745) target = $region56
        $region55: #{tpu_custom_call.1} parent=39 // pred_region
          %s748 = smul.u32 2, %s23
          %s750 = ssub.s32 256, 256
          %751 = vsyncadd %s741, %s750
          %s752 = smul.addr %s748, 128
          %s753 = scalar_lea.hbm %s5, %s752
          %s754 = sshll.u32 %s744, 4
          %s755 = int_to_ptr.vmem [resolvable:$true] %s754
          %760 = dma.vmem_to_hbm [thread:$0]  %s755, 256, %s753, %s741, 128, 128, 8
        $region56: #{tpu_custom_call.1} parent=39 // pred_fallthru
          _
      $region40: #{tpu_custom_call.1} parent=5 // pred_fallthru
        _
      %p761 = scmp.le.s32.totalorder 2, %s18
      // Predicated region
      $region57: #{tpu_custom_call.1} parent=5 // pred_check
        %p762 = pneg %p761
      $region58: #{tpu_custom_call.1} parent=5 // pred_check_branch
        %764 = sbr.rel (%p762) target = $region60
      $region59: #{tpu_custom_call.1} parent=5 // pred_region
        %s765 = ssub.s32 %s18, 2
        // Predicated region
        $region61: #{tpu_custom_call.1} parent=59 // pred_check
          %p766 = pneg %p157
        $region62: #{tpu_custom_call.1} parent=59 // pred_check_branch
          %768 = sbr.rel (%p766) target = $region64
        $region63: #{tpu_custom_call.1} parent=59 // pred_region
          %s769 = sand.u32 %s142, 1
          %s770 = scalar_lea.sflag [#allocation5], %s769
          %s771 = sand.u32 %s142, 1
          %s772 = smul.addr %s771, 16
          %s773 = scalar_lea.vmem [#allocation9], %s772
          %774 = dma.done %s770, 256
        $region64: #{tpu_custom_call.1} parent=59 // pred_fallthru
          _
      $region60: #{tpu_custom_call.1} parent=5 // pred_fallthru
        _
    $region6: #{tpu_custom_call.1} parent=1 // loop_footer
      %s22 = sadd.s32 1, %s18
    $region7: #{tpu_custom_call.1} parent=1 // loop_footer_branch
      %17 = sbr.rel target = $region3
    $region8: #{tpu_custom_call.1} parent=1 // loop_exit
      _
    %775 = vsyncpa [#allocation4], 1
    %s776 = scalar_lea.sflag [#allocation4], 1
    %777 = vsyncpa %s776, 1
    %778 = vsyncpa [#allocation7], 1
    %779 = vsyncpa [#allocation5], 1
    %s780 = scalar_lea.sflag [#allocation5], 1
    %781 = vsyncpa %s780, 1

</llo_original>
